<compile_context>
chip_gen: v7x
topology: tpu7x:2x2x1
jax: 0.10.0
libtpu: 0.0.40
codegen_flags: <defaults>
</compile_context>

<pallas_src>
import jax
import jax.numpy as jnp
from jax.experimental import pallas as pl
from jax.experimental.pallas import tpu as pltpu


def _plus_one_kernel(x_ref, o_ref):
    # Minimal VPU form: elementwise add of a splat constant.
    o_ref[...] = x_ref[...] + jnp.asarray(1, dtype=o_ref.dtype)


def plus_one_2d(x2d, tr):
    """x2d: (R, L) lane-dense slab; L multiple of 128, tr multiple of sublane pack."""
    R, L = x2d.shape
    grid = (pl.cdiv(R, tr),)
    return pl.pallas_call(
        _plus_one_kernel,
        out_shape=jax.ShapeDtypeStruct((R, L), x2d.dtype),
        grid_spec=pltpu.PrefetchScalarGridSpec(
            num_scalar_prefetch=0,
            grid=grid,
            in_specs=[pl.BlockSpec((tr, L), lambda i: (i, 0))],
            out_specs=pl.BlockSpec((tr, L), lambda i: (i, 0)),
        ),
        compiler_params=pltpu.CompilerParams(
            # Independent row blocks: shard across both TCs on v7x.
            dimension_semantics=("parallel",),
            # Explicit headroom; safe on v5e/v6e (128 MiB) and v7x (64 MiB/TC).
            vmem_limit_bytes=32 * 1024 * 1024,
        ),
    )(x2d)


# ~2 MiB per block: in+out double-buffering => ~8 MiB live VMEM.
_TARGET_BLOCK_BYTES = 2 * 1024 * 1024


def _sublane_pack(itemsize):
    # Rows packed per (8-sublane x 32-bit) vreg group: 8 f32, 16 bf16, 32 int8.
    return 8 * max(1, 4 // itemsize)


def _pick_tr(rows, lane_width, itemsize, sub):
    """Row-block height: ~2 MiB, multiple of the sublane pack, >=2 grid steps
    when the data allows (so v7x megacore gets both cores busy)."""
    tr = max(sub, (_TARGET_BLOCK_BYTES // (lane_width * itemsize)) // sub * sub)
    tr = min(tr, rows)
    if tr == rows and rows >= 2 * sub:
        # Split into at least two blocks; keep it sublane-aligned.
        tr = max(sub, (pl.cdiv(rows, 2) + sub - 1) // sub * sub)
        tr = min(tr, rows)
    return tr


def test_forward(x):
    """Equivalent of Test.forward: returns x + ones_like(x). Any-rank input."""
    orig_shape = x.shape
    n = x.size
    itemsize = jnp.dtype(x.dtype).itemsize
    sub = _sublane_pack(itemsize)

    # Fast path: widest lane width that divides n cleanly -> no padding,
    # no extra HBM copies beyond the kernel's own read+write.
    lane_width = None
    for cand in (4096, 2048, 1024, 512, 256, 128):
        if n % (cand * sub) == 0:
            lane_width = cand
            break

    if lane_width is not None:
        rows = n // lane_width
        tr = _pick_tr(rows, lane_width, itemsize, sub)
        x2d = jnp.reshape(x, (rows, lane_width))
        y2d = plus_one_2d(x2d, tr)
        return y2d.reshape(orig_shape)

    # Ragged fallback: pad only the tail up to a (rows_padded, 128) slab.
    lane_width = 128
    rows = pl.cdiv(n, lane_width)
    rows_padded = pl.cdiv(rows, sub) * sub
    tr = _pick_tr(rows_padded, lane_width, itemsize, sub)
    if rows_padded % tr:
        rows_padded = pl.cdiv(rows_padded, tr) * tr
    flat = jnp.ravel(x)
    flat = jnp.pad(flat, (0, rows_padded * lane_width - n))
    y2d = plus_one_2d(flat.reshape(rows_padded, lane_width), tr)
    return y2d.reshape(-1)[:n].reshape(orig_shape)


if __name__ == "__main__":
    key = jax.random.PRNGKey(0)

    # NCHW input, like a PyTorch conv-style tensor: batch=2, channels=4, 16x16
    x = jax.random.normal(key, (2, 4, 16, 16), dtype=jnp.float32)
    y = test_forward(x)
    jax.block_until_ready(y)
    ref = x + 1.0
    assert y.shape == x.shape and y.dtype == x.dtype
    assert jnp.max(jnp.abs(y - ref)) == 0.0

    # Exercise the ragged / sub-32-bit fallback path too (bf16, odd size).
    xb = jax.random.normal(jax.random.PRNGKey(1), (3, 5, 7)).astype(jnp.bfloat16)
    yb = test_forward(xb)
    jax.block_until_ready(yb)
    refb = xb + jnp.asarray(1, jnp.bfloat16)
    assert yb.shape == xb.shape and yb.dtype == xb.dtype
    assert jnp.max(jnp.abs((yb - refb).astype(jnp.float32))) == 0.0

    # A larger slab to exercise the multi-block pipelined path.
    xl = jax.random.normal(jax.random.PRNGKey(2), (8, 512, 1024), dtype=jnp.float32)
    yl = test_forward(xl)
    jax.block_until_ready(yl)
    assert jnp.max(jnp.abs(yl - (xl + 1.0))) == 0.0

    print("KERNEL_OK")
</pallas_src>

<mosaic_0001>
module attributes {stable_mosaic.version = 11 : i64} {
  func.func @_plus_one_kernel(%arg0: i32, %arg1: memref<8x256xf32, #tpu.memory_space<vmem>>, %arg2: memref<8x256xf32, #tpu.memory_space<vmem>>) attributes {dimension_semantics = [#tpu.dimension_semantics<parallel>], iteration_bounds = array<i64: 1>, scalar_prefetch = 0 : i64, scratch_operands = 0 : i64, tpu.core_type = #tpu.core_type<tc>, window_params = [{transform_indices = @transform_0, window_bounds = array<i64: 8, 256>}, {transform_indices = @transform_1, window_bounds = array<i64: 8, 256>}]} {
    %c0 = arith.constant 0 : index
    %c0_0 = arith.constant 0 : index
    %0 = vector.load %arg1[%c0, %c0_0] : memref<8x256xf32, #tpu.memory_space<vmem>>, vector<8x256xf32>
    %cst = arith.constant 1.000000e+00 : f32
    %1 = vector.broadcast %cst : f32 to vector<8x256xf32>
    %2 = arith.addf %0, %1 : vector<8x256xf32>
    %c0_1 = arith.constant 0 : index
    %c0_2 = arith.constant 0 : index
    %3 = vector.load %arg2[%c0_1, %c0_2] : memref<8x256xf32, #tpu.memory_space<vmem>>, vector<8x256xf32>
    tpu.vector_store %arg2[%c0_1, %c0_2], %2 {strides = array<i32>} : memref<8x256xf32, #tpu.memory_space<vmem>>, vector<8x256xf32>,
    return
  }
  func.func @transform_0(%arg0: i32) -> (i32, i32) {
    %c0_i32 = arith.constant 0 : i32
    %c0_i32_0 = arith.constant 0 : i32
    return %arg0, %c0_i32 : i32, i32
  }
  func.func @transform_1(%arg0: i32) -> (i32, i32) {
    %c0_i32 = arith.constant 0 : i32
    %c0_i32_0 = arith.constant 0 : i32
    return %arg0, %c0_i32 : i32, i32
  }
}

</mosaic_0001>

<llo_original>
// kernel: tpu_custom_call.1
$region0: #{tpu_custom_call.1}
  #allocation0 [shape = 'u32[]', space=smem, size = 0x4, offset = 0x4, fixed_abs, tag = 'smem constant byte address 0x4 - core index']
  #allocation1 [shape = 'u32[144,128]{1,0:T(1,128)}', space=vmem, size = 0x12000, scoped, tag = 'internal scratch']
  %s0 = inlined_call_operand.hbm [shape: f32[8,256], index: 0, kind: input, shape index: {}]
  %s1 = inlined_call_operand.hbm [shape: f32[8,256], index: 1, kind: output, shape index: {}]
  %s2 = sld [smem:[#allocation0]]
  $region18: #{tpu_custom_call.1} parent=0
    _
  %s4 = ssub.s32 1, %s2
  %s5 = scalar_select 0, %s4, %s2
  $region1: #{tpu_custom_call.1} parent=0
    #allocation2 [shape = 'u8[8192]{0}', space=vmem, size = 0x2000, scoped, tag = 'input window, operand 0, single buffered']
    #allocation3 [shape = 's32[1]{0}', space=sflag, size = 0x4, scoped, tag = 'scoped memory for tpu_custom_call.1']
    #allocation4 [shape = 's32[1]{0}', space=sflag, size = 0x4, scoped, tag = 'scoped memory for tpu_custom_call.1']
    #allocation5 [shape = 'u8[8192]{0}', space=vmem, size = 0x2000, scoped, tag = 'output window, operand 0, single buffered']
    %6 = vsyncpa [#allocation3], 0
    %7 = vsyncpa [#allocation4], 0
    // Predicated region
    $region2: #{tpu_custom_call.1} parent=1 // pred_check
      _
    $region3: #{tpu_custom_call.1} parent=1 // pred_check_branch
      %9 = sbr.rel (0) target = $region5
    $region4: #{tpu_custom_call.1} parent=1 // pred_region
      %s11 = ssub.s32 256, 256
      %12 = vsyncadd [#allocation3], %s11
      %s14 = sshll.u32 [#allocation2], 4
      %s15 = int_to_ptr.vmem [resolvable:$true] %s14
      %17 = dma.hbm_to_vmem [thread:$0]  %s0, 256, %s15, [#allocation3]
    $region5: #{tpu_custom_call.1} parent=1 // pred_fallthru
      _
    // Predicated region
    $region6: #{tpu_custom_call.1} parent=1 // pred_check
      _
    $region7: #{tpu_custom_call.1} parent=1 // pred_check_branch
      %19 = sbr.rel (0) target = $region9
    $region8: #{tpu_custom_call.1} parent=1 // pred_region
      %20 = dma.done [#allocation3], 256
    $region9: #{tpu_custom_call.1} parent=1 // pred_fallthru
      _
    %v21 = vld [vmem:[#allocation2] sm:$0xff]
    %v22 = vld [vmem:[#allocation2 + $0x8] sm:$0xff]
    %v23 = vadd.f32 %v21, 1.0
    %v24 = vadd.f32 %v22, 1.0
    %25 = vst [vmem:[#allocation5] sm:$0xff] %v23
    %26 = vst [vmem:[#allocation5 + $0x8] sm:$0xff] %v24
    // Predicated region
    $region10: #{tpu_custom_call.1} parent=1 // pred_check
      _
    $region11: #{tpu_custom_call.1} parent=1 // pred_check_branch
      %28 = sbr.rel (0) target = $region13
    $region12: #{tpu_custom_call.1} parent=1 // pred_region
      %s30 = ssub.s32 256, 256
      %31 = vsyncadd [#allocation4], %s30
      %s33 = sshll.u32 [#allocation5], 4
      %s34 = int_to_ptr.vmem [resolvable:$true] %s33
      %36 = dma.vmem_to_hbm [thread:$0]  %s34, 256, %s1, [#allocation4]
    $region13: #{tpu_custom_call.1} parent=1 // pred_fallthru
      _
    // Predicated region
    $region14: #{tpu_custom_call.1} parent=1 // pred_check
      _
    $region15: #{tpu_custom_call.1} parent=1 // pred_check_branch
      %38 = sbr.rel (0) target = $region17
    $region16: #{tpu_custom_call.1} parent=1 // pred_region
      %39 = dma.done [#allocation4], 256
    $region17: #{tpu_custom_call.1} parent=1 // pred_fallthru
      _
    %40 = vsyncpa [#allocation3], 1
    %41 = vsyncpa [#allocation4], 1

</llo_original>
